<compile_context>
chip_gen: v5e
topology: v5e:2x2
jax: 0.10.0
libtpu: 0.0.40
codegen_flags: <defaults>
</compile_context>

<pallas_src>
import functools

import numpy as np
import jax
import jax.numpy as jnp
from jax.experimental import pallas as pl
from jax.experimental.pallas import tpu as pltpu


def _round_up(x, m):
    return (x + m - 1) // m * m


def _pick_tile_h(hidden, cap=512):
    """Largest divisor of `hidden` <= cap, preferring multiples of 128.

    Capped at 512 so double-buffered bf16 weight tiles fit v7x's 64 MiB VMEM
    (v5e/v6e with 128 MiB could go up to 1024)."""
    best = None
    top = min(hidden, cap)
    for t in range(8, top + 1, 8):
        if hidden % t == 0:
            best = t
    for t in range(128, top + 1, 128):
        if hidden % t == 0:
            best = t
    if best is None:
        raise ValueError("hidden_dim must be a multiple of 8")
    return best


# ----------------------------------------------------------------------------
# Grouped expert FFN kernel:
#   for each token block i (owned by expert e = block_expert[i]):
#       y = (silu(x @ w1_e.T) * (x @ w3_e.T)) @ w2_e
# Grid = (token_blocks, hidden_tiles); hidden reduction axis is last and is
# accumulated in a f32 VMEM scratch, written back on the final reduction step.
# ----------------------------------------------------------------------------
def _grouped_ffn_kernel(block_expert_ref, x_ref, w13_ref, w2_ref, o_ref,
                        acc_ref, *, tile_h):
    del block_expert_ref  # only consumed by the index_maps
    k = pl.program_id(1)

    @pl.when(k == 0)
    def _():
        acc_ref[...] = jnp.zeros_like(acc_ref)

    x = x_ref[...]                                   # (tile_n, dim)    bf16
    w13 = w13_ref[0]                                 # (2*tile_h, dim)  bf16
    # x @ [w1_tile; w3_tile].T in a single MXU issue, f32 accumulation.
    dn = (((1,), (1,)), ((), ()))
    a = jax.lax.dot_general(x, w13, dn,
                            preferred_element_type=jnp.float32)  # (n, 2*th)
    a1 = a[:, :tile_h]
    a3 = a[:, tile_h:]
    h = (a1 * jax.nn.sigmoid(a1)) * a3               # SwiGLU, f32 on VPU/EUP
    acc_ref[...] += jnp.dot(h.astype(jnp.bfloat16), w2_ref[0],
                            preferred_element_type=jnp.float32)   # (n, dim)

    @pl.when(k == pl.num_programs(1) - 1)
    def _():
        o_ref[...] = acc_ref[...].astype(o_ref.dtype)


def grouped_expert_ffn(block_expert, x_sorted, w13_all, w2_all, *, tile_h):
    """x_sorted: (P, dim) bf16 tokens sorted/padded by expert.
    block_expert: (P // tile_n,) int32 expert id of each token block.
    w13_all: (E, 2*hidden, dim) bf16 (tile-interleaved [w1;w3]).
    w2_all:  (E, hidden, dim)   bf16.
    Returns (P, dim) float32."""
    P, dim = x_sorted.shape
    num_blocks = block_expert.shape[0]
    tile_n = P // num_blocks
    _, H2, _ = w13_all.shape
    hidden = w2_all.shape[1]
    assert H2 == 2 * hidden
    assert hidden % tile_h == 0 and P % tile_n == 0
    num_k = hidden // tile_h

    # Rough VMEM budget: double-buffered bf16 weight tiles + x/out buffers +
    # f32 accumulator.  Raised above scoped defaults, capped at 48 MiB so it
    # also leaves headroom on v7x (64 MiB VMEM / TC).
    est = (2 * (2 * tile_h * dim + tile_h * dim) * 2   # w13 + w2, x2 buffers
           + 2 * tile_n * dim * 2                      # x bf16,   x2 buffers
           + 2 * tile_n * dim * 4                      # out f32,  x2 buffers
           + tile_n * dim * 4)                         # accumulator
    vmem_limit = int(min(max(2 * est, 32 * 1024 * 1024), 48 * 1024 * 1024))

    kernel = functools.partial(_grouped_ffn_kernel, tile_h=tile_h)
    return pl.pallas_call(
        kernel,
        out_shape=jax.ShapeDtypeStruct((P, dim), jnp.float32),
        grid_spec=pltpu.PrefetchScalarGridSpec(
            num_scalar_prefetch=1,
            grid=(num_blocks, num_k),
            in_specs=[
                # tokens: resident across the hidden reduction
                pl.BlockSpec((tile_n, dim), lambda i, k, be: (i, 0)),
                # fused [w1;w3] tile of the expert owning token block i
                pl.BlockSpec((1, 2 * tile_h, dim),
                             lambda i, k, be: (be[i], k, 0)),
                # matching w2 tile of that expert
                pl.BlockSpec((1, tile_h, dim),
                             lambda i, k, be: (be[i], k, 0)),
            ],
            out_specs=pl.BlockSpec((tile_n, dim), lambda i, k, be: (i, 0)),
            scratch_shapes=[pltpu.VMEM((tile_n, dim), jnp.float32)],
        ),
        compiler_params=pltpu.CompilerParams(
            dimension_semantics=("parallel", "arbitrary"),
            vmem_limit_bytes=vmem_limit),
    )(block_expert, x_sorted, w13_all, w2_all)


# ----------------------------------------------------------------------------
# Routing / packing glue (device-side, static shapes -> no recompiles)
# ----------------------------------------------------------------------------
def _route_and_pack(inputs, selected, num_experts, tile_n):
    """Replicate tokens per selected expert, sort by expert, pad each expert
    group to a multiple of tile_n, and build the block->expert map."""
    T, dim = inputs.shape
    k = selected.shape[1]
    E = num_experts

    flat_expert = selected.reshape(-1).astype(jnp.int32)            # (T*k,)
    flat_token = jnp.repeat(jnp.arange(T, dtype=jnp.int32), k)      # (T*k,)
    order = jnp.argsort(flat_expert)
    sorted_expert = flat_expert[order]
    sorted_token = flat_token[order]

    group_sizes = jnp.bincount(flat_expert, length=E)               # (E,)
    padded_sizes = ((group_sizes + tile_n - 1) // tile_n) * tile_n
    group_starts = jnp.concatenate(
        [jnp.zeros((1,), group_sizes.dtype), jnp.cumsum(group_sizes)[:-1]])
    padded_starts = jnp.concatenate(
        [jnp.zeros((1,), padded_sizes.dtype), jnp.cumsum(padded_sizes)[:-1]])

    j = jnp.arange(T * k, dtype=jnp.int32)
    dest = padded_starts[sorted_expert] + (j - group_starts[sorted_expert])

    # Static padded capacity (upper bound on sum of padded group sizes).
    P = _round_up(T * k + E * (tile_n - 1), tile_n)
    x_bf16 = inputs.astype(jnp.bfloat16)
    x_sorted = jnp.zeros((P, dim), jnp.bfloat16).at[dest].set(
        x_bf16[sorted_token])

    padded_ends = jnp.cumsum(padded_sizes)
    block_start = jnp.arange(P // tile_n, dtype=jnp.int32) * tile_n
    block_expert = jnp.searchsorted(padded_ends, block_start, side="right")
    block_expert = jnp.clip(block_expert, 0, E - 1).astype(jnp.int32)

    return x_sorted, block_expert, dest, sorted_token, sorted_expert


# ----------------------------------------------------------------------------
# MoeLayer wrapper
# ----------------------------------------------------------------------------
class MoeLayerPallas:
    def __init__(self, dim, hidden_dim, num_experts, num_experts_per_tok, key,
                 *, tile_h=None, tile_n=128):
        self.dim = dim
        self.hidden_dim = hidden_dim
        self.num_experts = num_experts
        self.num_experts_per_tok = num_experts_per_tok
        self.tile_h = _pick_tile_h(hidden_dim) if tile_h is None else tile_h
        self.tile_n = tile_n
        assert hidden_dim % self.tile_h == 0
        assert self.tile_h % 8 == 0 and self.tile_n % 8 == 0

        keys = jax.random.split(key, 1 + 3 * num_experts)
        # gate weight (num_experts, dim) — created but unused by the reference
        # forward (routing there is torch.multinomial over uniform probs).
        self.gate_w = 0.02 * jax.random.normal(keys[0], (num_experts, dim),
                                               jnp.float32)

        # Expert weights stored in bf16 (streamed from HBM by the kernel).
        nk = hidden_dim // self.tile_h
        self.expert_ws = {}
        w13_slabs, w2_slabs = [], []
        for ei in range(num_experts):
            kw1, kw3, kw2 = keys[1 + 3 * ei: 4 + 3 * ei]
            w1 = (0.05 * jax.random.normal(kw1, (hidden_dim, dim),
                                           jnp.float32)).astype(jnp.bfloat16)
            w3 = (0.05 * jax.random.normal(kw3, (hidden_dim, dim),
                                           jnp.float32)).astype(jnp.bfloat16)
            w2 = (0.05 * jax.random.normal(kw2, (hidden_dim, dim),
                                           jnp.float32)).astype(jnp.bfloat16)
            self.expert_ws[ei] = (w1, w3, w2)
            # Tile-interleave w1/w3: slab block k = [w1 tile k ; w3 tile k]
            # -> one contiguous weight DMA and one MXU dot per hidden tile.
            w13 = jnp.concatenate(
                [w1.reshape(nk, self.tile_h, dim),
                 w3.reshape(nk, self.tile_h, dim)], axis=1
            ).reshape(2 * hidden_dim, dim)
            w13_slabs.append(w13)
            w2_slabs.append(w2)
        self.w13_all = jnp.stack(w13_slabs)   # (E, 2*hidden, dim) bf16
        self.w2_all = jnp.stack(w2_slabs)     # (E, hidden, dim)   bf16

    def forward(self, inputs, route_key):
        T = inputs.shape[0]
        E, k = self.num_experts, self.num_experts_per_tok
        # torch.multinomial(uniform probs, k, replacement=False) == pick k
        # distinct experts uniformly at random per token.
        scores = jax.random.uniform(route_key, (T, E))
        selected = jnp.argsort(-scores, axis=-1)[:, :k].astype(jnp.int32)

        x_sorted, block_expert, dest, sorted_token, sorted_expert = \
            _route_and_pack(inputs, selected, E, self.tile_n)

        expert_out = grouped_expert_ffn(block_expert, x_sorted,
                                        self.w13_all, self.w2_all,
                                        tile_h=self.tile_h)

        # TODO(synk): the reference module discards `ey` and returns zeros
        # (and never uses the gate / per-token `weights`); we return the
        # kernel output separately only so it can be verified.
        results = jnp.zeros_like(inputs)
        aux = dict(expert_out=expert_out, dest=dest,
                   sorted_token=sorted_token, sorted_expert=sorted_expert,
                   block_expert=block_expert, selected=selected)
        return results, aux


def _expert_ref(x, w1, w3, w2):
    """Pure-JAX reference (f32 math on the bf16 weights/inputs)."""
    x = x.astype(jnp.float32)
    a1 = x @ w1.T.astype(jnp.float32)
    a3 = x @ w3.T.astype(jnp.float32)
    return (a1 * jax.nn.sigmoid(a1) * a3) @ w2.astype(jnp.float32)


if __name__ == "__main__":
    # Small, shape-consistent configuration (reference: dim=4096,
    # hidden=14336, 8 experts, top-2; at real sizes use tile_h=512,
    # tile_n=128 — the class defaults pick those automatically).
    dim, hidden_dim = 256, 512
    num_experts, num_experts_per_tok = 4, 2
    num_tokens = 16

    root = jax.random.PRNGKey(0)
    k_in, k_params, k_route = jax.random.split(root, 3)
    inputs = jax.random.normal(k_in, (num_tokens, dim), jnp.float32)

    layer = MoeLayerPallas(dim, hidden_dim, num_experts, num_experts_per_tok,
                           k_params, tile_h=128, tile_n=16)
    results, aux = layer.forward(inputs, k_route)
    results = jax.block_until_ready(results)
    out = jax.block_until_ready(aux["expert_out"])

    # Output semantics: reference returns zeros_like(inputs).
    assert results.shape == inputs.shape
    assert bool(jnp.all(results == 0))

    # Verify the grouped SwiGLU kernel against a pure-JAX reference.
    x_bf16 = inputs.astype(jnp.bfloat16)
    out_np = np.asarray(out)
    dest = np.asarray(aux["dest"])
    sorted_token = np.asarray(aux["sorted_token"])
    sorted_expert = np.asarray(aux["sorted_expert"])
    for ei in range(num_experts):
        m = sorted_expert == ei
        if not m.any():
            continue
        w1, w3, w2 = layer.expert_ws[ei]
        ref = _expert_ref(x_bf16[sorted_token[m]], w1, w3, w2)
        np.testing.assert_allclose(out_np[dest[m]], np.asarray(ref),
                                   rtol=2e-2, atol=2e-2)

    print("KERNEL_OK")
</pallas_src>

<mosaic_0001>
module attributes {stable_mosaic.version = 11 : i64} {
  func.func @_grouped_ffn_kernel(%arg0: i32, %arg1: i32, %arg2: memref<6xi32, #tpu.memory_space<smem>>, %arg3: memref<16x256xbf16, #tpu.memory_space<vmem>>, %arg4: memref<1x256x256xbf16, #tpu.memory_space<vmem>>, %arg5: memref<1x128x256xbf16, #tpu.memory_space<vmem>>, %arg6: memref<16x256xf32, #tpu.memory_space<vmem>>, %arg7: memref<16x256xf32, #tpu.memory_space<vmem>>) attributes {dimension_semantics = [#tpu.dimension_semantics<parallel>, #tpu.dimension_semantics<arbitrary>], iteration_bounds = array<i64: 6, 4>, scalar_prefetch = 1 : i64, scratch_operands = 1 : i64, tpu.core_type = #tpu.core_type<tc>, window_params = [{transform_indices = @transform_0, window_bounds = array<i64: 16, 256>}, {transform_indices = @transform_1, window_bounds = array<i64: 1, 256, 256>}, {transform_indices = @transform_2, window_bounds = array<i64: 1, 128, 256>}, {transform_indices = @transform_3, window_bounds = array<i64: 16, 256>}]} {
    %c0_i32 = arith.constant 0 : i32
    %0 = arith.cmpi eq, %arg1, %c0_i32 : i32
    %1 = arith.extui %0 : i1 to i32
    %c0_i32_0 = arith.constant 0 : i32
    %2 = arith.cmpi ne, %1, %c0_i32_0 : i32
    scf.if %2 {
      %cst_15 = arith.constant 0.000000e+00 : f32
      %26 = vector.broadcast %cst_15 : f32 to vector<16x256xf32>
      %c0_16 = arith.constant 0 : index
      %c0_17 = arith.constant 0 : index
      %27 = vector.load %arg7[%c0_16, %c0_17] : memref<16x256xf32, #tpu.memory_space<vmem>>, vector<16x256xf32>
      tpu.vector_store %arg7[%c0_16, %c0_17], %26 {strides = array<i32>} : memref<16x256xf32, #tpu.memory_space<vmem>>, vector<16x256xf32>,
    } else {
    }
    %c0 = arith.constant 0 : index
    %c0_1 = arith.constant 0 : index
    %3 = vector.load %arg3[%c0, %c0_1] : memref<16x256xbf16, #tpu.memory_space<vmem>>, vector<16x256xbf16>
    %c0_2 = arith.constant 0 : index
    %c0_3 = arith.constant 0 : index
    %c0_4 = arith.constant 0 : index
    %4 = vector.load %arg4[%c0_2, %c0_3, %c0_4] : memref<1x256x256xbf16, #tpu.memory_space<vmem>>, vector<1x256x256xbf16>
    %5 = vector.shape_cast %4 : vector<1x256x256xbf16> to vector<256x256xbf16>
    %cst = arith.constant dense<0.000000e+00> : vector<16x256xf32>
    %6 = tpu.matmul %3, %5, %cst {dimension_numbers = #tpu.dot_dimension_numbers<[1], [1], [0], [0], [0, 0, 1, 0], [], []>} : vector<16x256xbf16>, vector<256x256xbf16>, vector<16x256xf32> -> vector<16x256xf32>
    %7 = vector.extract_strided_slice %6 {offsets = [0, 0], sizes = [16, 128], strides = [1, 1]} : vector<16x256xf32> to vector<16x128xf32>
    %8 = vector.extract_strided_slice %6 {offsets = [0, 128], sizes = [16, 128], strides = [1, 1]} : vector<16x256xf32> to vector<16x128xf32>
    %9 = arith.negf %7 : vector<16x128xf32>
    %10 = math.exp %9 : vector<16x128xf32>
    %cst_5 = arith.constant 1.000000e+00 : f32
    %11 = vector.broadcast %cst_5 : f32 to vector<16x128xf32>
    %12 = arith.addf %11, %10 : vector<16x128xf32>
    %13 = arith.divf %11, %12 : vector<16x128xf32>
    %14 = arith.mulf %7, %13 : vector<16x128xf32>
    %15 = arith.mulf %14, %8 : vector<16x128xf32>
    %c0_6 = arith.constant 0 : index
    %c0_7 = arith.constant 0 : index
    %16 = vector.load %arg7[%c0_6, %c0_7] : memref<16x256xf32, #tpu.memory_space<vmem>>, vector<16x256xf32>
    %17 = arith.truncf %15 : vector<16x128xf32> to vector<16x128xbf16>
    %c0_8 = arith.constant 0 : index
    %c0_9 = arith.constant 0 : index
    %c0_10 = arith.constant 0 : index
    %18 = vector.load %arg5[%c0_8, %c0_9, %c0_10] : memref<1x128x256xbf16, #tpu.memory_space<vmem>>, vector<1x128x256xbf16>
    %19 = vector.shape_cast %18 : vector<1x128x256xbf16> to vector<128x256xbf16>
    %cst_11 = arith.constant dense<0.000000e+00> : vector<16x256xf32>
    %20 = tpu.matmul %17, %19, %cst_11 {dimension_numbers = #tpu.dot_dimension_numbers<[1], [0], [0], [1], [0, 0, 1, 1], [], []>} : vector<16x128xbf16>, vector<128x256xbf16>, vector<16x256xf32> -> vector<16x256xf32>
    %21 = arith.addf %16, %20 : vector<16x256xf32>
    %c0_12 = arith.constant 0 : index
    %c0_13 = arith.constant 0 : index
    %22 = vector.load %arg7[%c0_12, %c0_13] : memref<16x256xf32, #tpu.memory_space<vmem>>, vector<16x256xf32>
    tpu.vector_store %arg7[%c0_12, %c0_13], %21 {strides = array<i32>} : memref<16x256xf32, #tpu.memory_space<vmem>>, vector<16x256xf32>,
    %c3_i32 = arith.constant 3 : i32
    %23 = arith.cmpi eq, %arg1, %c3_i32 : i32
    %24 = arith.extui %23 : i1 to i32
    %c0_i32_14 = arith.constant 0 : i32
    %25 = arith.cmpi ne, %24, %c0_i32_14 : i32
    scf.if %25 {
      %c0_15 = arith.constant 0 : index
      %c0_16 = arith.constant 0 : index
      %26 = vector.load %arg7[%c0_15, %c0_16] : memref<16x256xf32, #tpu.memory_space<vmem>>, vector<16x256xf32>
      %c0_17 = arith.constant 0 : index
      %c0_18 = arith.constant 0 : index
      %27 = vector.load %arg6[%c0_17, %c0_18] : memref<16x256xf32, #tpu.memory_space<vmem>>, vector<16x256xf32>
      tpu.vector_store %arg6[%c0_17, %c0_18], %26 {strides = array<i32>} : memref<16x256xf32, #tpu.memory_space<vmem>>, vector<16x256xf32>,
    } else {
    }
    return
  }
  func.func @transform_0(%arg0: i32, %arg1: i32, %arg2: memref<6xi32, #tpu.memory_space<smem>>) -> (i32, i32) {
    %c0_i32 = arith.constant 0 : i32
    %c0_i32_0 = arith.constant 0 : i32
    return %arg0, %c0_i32 : i32, i32
  }
  func.func @transform_1(%arg0: i32, %arg1: i32, %arg2: memref<6xi32, #tpu.memory_space<smem>>) -> (i32, i32, i32) {
    %0 = arith.index_cast %arg0 : i32 to index
    %1 = memref.load %arg2[%0] : memref<6xi32, #tpu.memory_space<smem>>
    %c0_i32 = arith.constant 0 : i32
    %c0_i32_0 = arith.constant 0 : i32
    return %1, %arg1, %c0_i32 : i32, i32, i32
  }
  func.func @transform_2(%arg0: i32, %arg1: i32, %arg2: memref<6xi32, #tpu.memory_space<smem>>) -> (i32, i32, i32) {
    %0 = arith.index_cast %arg0 : i32 to index
    %1 = memref.load %arg2[%0] : memref<6xi32, #tpu.memory_space<smem>>
    %c0_i32 = arith.constant 0 : i32
    %c0_i32_0 = arith.constant 0 : i32
    return %1, %arg1, %c0_i32 : i32, i32, i32
  }
  func.func @transform_3(%arg0: i32, %arg1: i32, %arg2: memref<6xi32, #tpu.memory_space<smem>>) -> (i32, i32) {
    %c0_i32 = arith.constant 0 : i32
    %c0_i32_0 = arith.constant 0 : i32
    return %arg0, %c0_i32 : i32, i32
  }
}

</mosaic_0001>

<llo_original>
// kernel: tpu_custom_call.1
$region0: #{tpu_custom_call.1}
  #allocation0 [shape = 'u32[]', space=smem, size = 0x4, offset = 0x4, fixed_abs, tag = 'smem constant byte address 0x4 - core index']
  #allocation1 [shape = 'u32[72,128]{1,0:T(1,128)}', space=vmem, size = 0x9000, scoped, tag = 'internal scratch']
  #allocation2 [shape = 'f32[16,256]{1,0:T(8,128)}', space=vmem, size = 0x4000, scoped, tag = 'scratch operand']
  #allocation3 [shape = 's32[1]{0}', space=sflag, size = 0x4, scoped, tag = 'scoped memory for tpu_custom_call.1']
  #allocation4 [shape = 'u8[512]{0}', space=smem, size = 0x200, scoped, tag = 'prefetched SMEM operand 0']
  %s0 = inlined_call_operand.hbm [shape: s32[6], index: 0, kind: input, shape index: {}]
  %s1 = inlined_call_operand.hbm [shape: bf16[96,256], index: 1, kind: input, shape index: {}]
  %s2 = inlined_call_operand.hbm [shape: bf16[4,1024,256], index: 2, kind: input, shape index: {}]
  %s3 = inlined_call_operand.hbm [shape: bf16[4,512,256], index: 3, kind: input, shape index: {}]
  %s4 = inlined_call_operand.hbm [shape: f32[96,256], index: 4, kind: output, shape index: {}]
  %s5 = sld [smem:[#allocation0]]
  $region65: #{tpu_custom_call.1} parent=0
    _
  %s7 = ssub.s32 1, %s5
  %s8 = scalar_select 0, %s7, %s5
  %s10 = sshll.u32 %s0, 4
  %s11 = int_to_ptr.hbm [resolvable:$true] %s10
  %13 = dma.hbm_to_smem %s11, 16, [#allocation4], [#allocation3]
  %15 = dma.done [#allocation3], 16
  %16 = sfence
  $region1: #{tpu_custom_call.1} parent=0
    #allocation5 [shape = 'u8[16384]{0}', space=vmem, size = 0x4000, scoped, tag = 'input window, operand 1']
    #allocation6 [shape = 's32[2]{0}', space=sflag, size = 0x8, scoped, tag = 'scoped memory for tpu_custom_call.1']
    #allocation7 [shape = 's32[2]{0}', space=sflag, size = 0x8, scoped, tag = 'scoped memory for tpu_custom_call.1']
    #allocation8 [shape = 'u8[262144]{0}', space=vmem, size = 0x40000, scoped, tag = 'input window, operand 2']
    #allocation9 [shape = 's32[2]{0}', space=sflag, size = 0x8, scoped, tag = 'scoped memory for tpu_custom_call.1']
    #allocation10 [shape = 'u8[131072]{0}', space=vmem, size = 0x20000, scoped, tag = 'input window, operand 3']
    #allocation11 [shape = 'u8[32768]{0}', space=vmem, size = 0x8000, scoped, tag = 'output window, operand 0']
    %17 = vsyncpa [#allocation6], 0
    %s18 = scalar_lea.sflag [#allocation6], 1
    %19 = vsyncpa %s18, 0
    %20 = vsyncpa [#allocation9], 0
    %s21 = scalar_lea.sflag [#allocation9], 1
    %22 = vsyncpa %s21, 0
    %23 = vsyncpa [#allocation7], 0
    %s24 = scalar_lea.sflag [#allocation7], 1
    %25 = vsyncpa %s24, 0
    loop: start=0, step=1, limit=26
    $region2: #{tpu_custom_call.1} parent=1 // loop_pre_header
      _
    $region3: #{tpu_custom_call.1} parent=1 // loop_header
      %s27 = sphi 0, %s31
      %p28 = scmp.ge.s32.totalorder %s27, 26
      %s34 = sphi 0, %s46
      %s35 = sphi 0, %s42
      %s36 = sphi 0, %s34
      %s37 = sphi 0, %s35
      %s38 = sphi 0, %s36
      %s39 = sphi 0, %s37
      %s49 = sphi 0, %s51
      %s52 = sphi 0, %s49
      %s53 = sphi 0, %s52
      %s69 = sphi 0, %s53
      %s79 = sphi 0, %s81
      %s82 = sphi 0, %s79
      %s83 = sphi 0, %s82
      %s99 = sphi 0, %s83
      %s109 = sphi 0, %s111
      %s112 = sphi 0, %s109
      %s113 = sphi 0, %s112
      %s129 = sphi 0, %s113
      %s135 = sphi 0, %s137
      %s138 = sphi 0, %s135
      %s139 = sphi 0, %s138
      %s155 = sphi 0, %s139
    $region4: #{tpu_custom_call.1} parent=1 // loop_header_branch
      %30 = sbr.rel (%p28) target = $region8
    $region5: #{tpu_custom_call.1} parent=1 // loop_body
      %s32 = ssub.s32 %s27, 1
      %s33 = ssub.s32 %s27, 2
      %s40 = sadd.s32 1, %s35
      %p41 = scmp.ge.s32.totalorder %s40, 4
      %s42 = scalar_select %p41, 0, %s40
      %s43 = sadd.s32 1, %s34
      %s44 = scalar_select %p41, %s43, %s34
      %p45 = scmp.ge.s32.totalorder %s44, 6
      %s46 = scalar_select %p45, 0, %s44
      %s47 = ssub.s32 %s34, %s46
      %p48 = scmp.eq.s32.totalorder %s47, 0
      %s50 = sadd.s32 %s49, 1
      %s51 = scalar_select %p48, %s49, %s50
      %p54 = pneg %p48
      %p55 = scmp.eq.s32.totalorder %s27, 23
      %p56 = por %p54, %p55
      %p57 = scmp.ne.s32.totalorder %s49, %s52
      %p58 = scmp.eq.s32.totalorder %s27, 0
      %p59 = por %p57, %p58
      %p60 = scmp.ne.s32.totalorder %s49, %s52
      %p61 = scmp.eq.s32.totalorder %s32, 23
      %p62 = por %p60, %p61
      %p63 = scmp.ne.s32.totalorder %s52, %s53
      %p64 = scmp.eq.s32.totalorder %s32, 0
      %p65 = por %p63, %p64
      %p66 = scmp.ne.s32.totalorder %s52, %s53
      %p67 = scmp.eq.s32.totalorder %s33, 23
      %p68 = por %p66, %p67
      %p70 = scmp.ne.s32.totalorder %s53, %s69
      %p71 = scmp.eq.s32.totalorder %s33, 0
      %p72 = por %p70, %p71
      %s73 = sld [smem:[#allocation4 + %s34]]
      %s74 = sld [smem:[#allocation4 + %s46]]
      %s75 = ssub.s32 %s73, %s74
      %s76 = ssub.s32 %s35, %s42
      %s77 = sor.u32 %s75, %s76
      %p78 = scmp.eq.s32.totalorder %s77, 0
      %s80 = sadd.s32 %s79, 1
      %s81 = scalar_select %p78, %s79, %s80
      %p84 = pneg %p78
      %p85 = scmp.eq.s32.totalorder %s27, 23
      %p86 = por %p84, %p85
      %p87 = scmp.ne.s32.totalorder %s79, %s82
      %p88 = scmp.eq.s32.totalorder %s27, 0
      %p89 = por %p87, %p88
      %p90 = scmp.ne.s32.totalorder %s79, %s82
      %p91 = scmp.eq.s32.totalorder %s32, 23
      %p92 = por %p90, %p91
      %p93 = scmp.ne.s32.totalorder %s82, %s83
      %p94 = scmp.eq.s32.totalorder %s32, 0
      %p95 = por %p93, %p94
      %p96 = scmp.ne.s32.totalorder %s82, %s83
      %p97 = scmp.eq.s32.totalorder %s33, 23
      %p98 = por %p96, %p97
      %p100 = scmp.ne.s32.totalorder %s83, %s99
      %p101 = scmp.eq.s32.totalorder %s33, 0
      %p102 = por %p100, %p101
      %s103 = sld [smem:[#allocation4 + %s34]]
      %s104 = sld [smem:[#allocation4 + %s46]]
      %s105 = ssub.s32 %s103, %s104
      %s106 = ssub.s32 %s35, %s42
      %s107 = sor.u32 %s105, %s106
      %p108 = scmp.eq.s32.totalorder %s107, 0
      %s110 = sadd.s32 %s109, 1
      %s111 = scalar_select %p108, %s109, %s110
      %p114 = pneg %p108
      %p115 = scmp.eq.s32.totalorder %s27, 23
      %p116 = por %p114, %p115
      %p117 = scmp.ne.s32.totalorder %s109, %s112
      %p118 = scmp.eq.s32.totalorder %s27, 0
      %p119 = por %p117, %p118
      %p120 = scmp.ne.s32.totalorder %s109, %s112
      %p121 = scmp.eq.s32.totalorder %s32, 23
      %p122 = por %p120, %p121
      %p123 = scmp.ne.s32.totalorder %s112, %s113
      %p124 = scmp.eq.s32.totalorder %s32, 0
      %p125 = por %p123, %p124
      %p126 = scmp.ne.s32.totalorder %s112, %s113
      %p127 = scmp.eq.s32.totalorder %s33, 23
      %p128 = por %p126, %p127
      %p130 = scmp.ne.s32.totalorder %s113, %s129
      %p131 = scmp.eq.s32.totalorder %s33, 0
      %p132 = por %p130, %p131
      %s133 = ssub.s32 %s34, %s46
      %p134 = scmp.eq.s32.totalorder %s133, 0
      %s136 = sadd.s32 %s135, 1
      %s137 = scalar_select %p134, %s135, %s136
      %p140 = pneg %p134
      %p141 = scmp.eq.s32.totalorder %s27, 23
      %p142 = por %p140, %p141
      %p143 = scmp.ne.s32.totalorder %s135, %s138
      %p144 = scmp.eq.s32.totalorder %s27, 0
      %p145 = por %p143, %p144
      %p146 = scmp.ne.s32.totalorder %s135, %s138
      %p147 = scmp.eq.s32.totalorder %s32, 23
      %p148 = por %p146, %p147
      %p149 = scmp.ne.s32.totalorder %s138, %s139
      %p150 = scmp.eq.s32.totalorder %s32, 0
      %p151 = por %p149, %p150
      %p152 = scmp.ne.s32.totalorder %s138, %s139
      %p153 = scmp.eq.s32.totalorder %s33, 23
      %p154 = por %p152, %p153
      %p156 = scmp.ne.s32.totalorder %s139, %s155
      %p157 = scmp.eq.s32.totalorder %s33, 0
      %p158 = por %p156, %p157
      %p159 = scmp.le.s32.totalorder 1, %s27
      %p160 = scmp.lt.s32.totalorder %s27, 25
      %p161 = pnand %p159, %p160
      %p162 = pneg %p161
      // Predicated region
      $region9: #{tpu_custom_call.1} parent=5 // pred_check
        _
      $region10: #{tpu_custom_call.1} parent=5 // pred_check_branch
        %164 = sbr.rel (%p161) target = $region12
      $region11: #{tpu_custom_call.1} parent=5 // pred_region
        %s165 = ssub.s32 %s27, 1
      $region12: #{tpu_custom_call.1} parent=5 // pred_fallthru
        _
      %p166 = scmp.lt.s32.totalorder %s27, 24
      // Predicated region
      $region13: #{tpu_custom_call.1} parent=5 // pred_check
        %p167 = pneg %p166
      $region14: #{tpu_custom_call.1} parent=5 // pred_check_branch
        %169 = sbr.rel (%p167) target = $region16
      $region15: #{tpu_custom_call.1} parent=5 // pred_region
        // Predicated region
        $region17: #{tpu_custom_call.1} parent=15 // pred_check
          %p170 = pneg %p59
        $region18: #{tpu_custom_call.1} parent=15 // pred_check_branch
          %172 = sbr.rel (%p170) target = $region20
        $region19: #{tpu_custom_call.1} parent=15 // pred_region
          %s173 = sand.u32 %s49, 1
          %s174 = scalar_lea.sflag [#allocation6], %s173
          %s175 = sand.u32 %s49, 1
          %s176 = smul.addr %s175, 16
          %s177 = scalar_lea.vmem [#allocation5], %s176
          %s178 = smul.u32 2, %s34
          %180 = vsyncadd %s174, 0
          %s181 = smul.addr %s178, 2
          %s182 = smul.addr %s181, 4
          %s183 = scalar_lea.hbm %s1, %s182
          %s184 = sshll.u32 %s183, 4
          %s185 = int_to_ptr.hbm [resolvable:$true] %s184
          %s186 = sshll.u32 %s177, 4
          %s187 = int_to_ptr.vmem [resolvable:$true] %s186
          %192 = dma.hbm_to_vmem [thread:$0]  %s185, 256, %s187, %s174, 128, 128, 8
        $region20: #{tpu_custom_call.1} parent=15 // pred_fallthru
          _
        // Predicated region
        $region21: #{tpu_custom_call.1} parent=15 // pred_check
          %p193 = pneg %p89
        $region22: #{tpu_custom_call.1} parent=15 // pred_check_branch
          %195 = sbr.rel (%p193) target = $region24
        $region23: #{tpu_custom_call.1} parent=15 // pred_region
          %s196 = sand.u32 %s27, 1
          %s197 = scalar_lea.sflag [#allocation9], %s196
          %s198 = sand.u32 %s79, 1
          %s199 = smul.addr %s198, 256
          %s200 = scalar_lea.vmem [#allocation8], %s199
          %s201 = sld [smem:[#allocation4 + %s34]]
          %s202 = smul.u32 32, %s35
          %204 = vsyncadd %s197, 0
          %s205 = smul.addr %s202, 2
          %s206 = smul.addr %s201, 256
          %s207 = sadd.s32 %s205, %s206
          %s208 = smul.addr %s207, 4
          %s209 = scalar_lea.hbm %s2, %s208
          %s210 = sshll.u32 %s209, 4
          %s211 = int_to_ptr.hbm [resolvable:$true] %s210
          %s212 = sshll.u32 %s200, 4
          %s213 = int_to_ptr.vmem [resolvable:$true] %s212
          %218 = dma.hbm_to_vmem [thread:$0]  %s211, 4096, %s213, %s197, 128, 128, 8
        $region24: #{tpu_custom_call.1} parent=15 // pred_fallthru
          _
        // Predicated region
        $region25: #{tpu_custom_call.1} parent=15 // pred_check
          %p219 = pneg %p119
        $region26: #{tpu_custom_call.1} parent=15 // pred_check_branch
          %221 = sbr.rel (%p219) target = $region28
        $region27: #{tpu_custom_call.1} parent=15 // pred_region
          %s222 = sand.u32 %s27, 1
          %s223 = scalar_lea.sflag [#allocation9], %s222
          %s224 = sand.u32 %s109, 1
          %s225 = smul.addr %s224, 128
          %s226 = scalar_lea.vmem [#allocation10], %s225
          %s227 = sld [smem:[#allocation4 + %s34]]
          %s228 = smul.u32 16, %s35
          %230 = vsyncadd %s223, 0
          %s231 = smul.addr %s228, 2
          %s232 = smul.addr %s227, 128
          %s233 = sadd.s32 %s231, %s232
          %s234 = smul.addr %s233, 4
          %s235 = scalar_lea.hbm %s3, %s234
          %s236 = sshll.u32 %s235, 4
          %s237 = int_to_ptr.hbm [resolvable:$true] %s236
          %s238 = sshll.u32 %s226, 4
          %s239 = int_to_ptr.vmem [resolvable:$true] %s238
          %244 = dma.hbm_to_vmem [thread:$0]  %s237, 2048, %s239, %s223, 128, 128, 8
        $region28: #{tpu_custom_call.1} parent=15 // pred_fallthru
          _
      $region16: #{tpu_custom_call.1} parent=5 // pred_fallthru
        _
      %p245 = scmp.le.s32.totalorder 1, %s27
      %p246 = scmp.lt.s32.totalorder %s27, 25
      %p247 = pnand %p245, %p246
      %p248 = pneg %p247
      // Predicated region
      $region29: #{tpu_custom_call.1} parent=5 // pred_check
        _
      $region30: #{tpu_custom_call.1} parent=5 // pred_check_branch
        %250 = sbr.rel (%p247) target = $region32
      $region31: #{tpu_custom_call.1} parent=5 // pred_region
        %s251 = ssub.s32 %s27, 1
        %s252 = sand.u32 %s52, 1
        %s253 = scalar_lea.sflag [#allocation6], %s252
        %s254 = sand.u32 %s52, 1
        %s255 = smul.addr %s254, 16
        %s256 = scalar_lea.vmem [#allocation5], %s255
        // Predicated region
        $region33: #{tpu_custom_call.1} parent=31 // pred_check
          %p257 = pneg %p65
        $region34: #{tpu_custom_call.1} parent=31 // pred_check_branch
          %259 = sbr.rel (%p257) target = $region36
        $region35: #{tpu_custom_call.1} parent=31 // pred_region
          %261 = dma.done %s253, 256
        $region36: #{tpu_custom_call.1} parent=31 // pred_fallthru
          _
        %s262 = sand.u32 %s32, 1
        %s263 = scalar_lea.sflag [#allocation9], %s262
        %s264 = sand.u32 %s82, 1
        %s265 = smul.addr %s264, 256
        %s266 = scalar_lea.vmem [#allocation8], %s265
        // Predicated region
        $region37: #{tpu_custom_call.1} parent=31 // pred_check
          %p267 = pneg %p95
        $region38: #{tpu_custom_call.1} parent=31 // pred_check_branch
          %269 = sbr.rel (%p267) target = $region40
        $region39: #{tpu_custom_call.1} parent=31 // pred_region
          %271 = dma.done %s263, 4096
        $region40: #{tpu_custom_call.1} parent=31 // pred_fallthru
          _
        %s272 = sand.u32 %s32, 1
        %s273 = scalar_lea.sflag [#allocation9], %s272
        %s274 = sand.u32 %s112, 1
        %s275 = smul.addr %s274, 128
        %s276 = scalar_lea.vmem [#allocation10], %s275
        // Predicated region
        $region41: #{tpu_custom_call.1} parent=31 // pred_check
          %p277 = pneg %p125
        $region42: #{tpu_custom_call.1} parent=31 // pred_check_branch
          %279 = sbr.rel (%p277) target = $region44
        $region43: #{tpu_custom_call.1} parent=31 // pred_region
          %281 = dma.done %s273, 2048
        $region44: #{tpu_custom_call.1} parent=31 // pred_fallthru
          _
        %s282 = sand.u32 %s52, 1
        %s283 = scalar_lea.sflag [#allocation6], %s282
        %s284 = sand.u32 %s52, 1
        %s285 = smul.addr %s284, 16
        %s286 = scalar_lea.vmem [#allocation5], %s285
        %p287 = pneg %p65
        %p288 = pneg %p62
        %s289 = sand.u32 %s32, 1
        %s290 = scalar_lea.sflag [#allocation9], %s289
        %s291 = sand.u32 %s82, 1
        %s292 = smul.addr %s291, 256
        %s293 = scalar_lea.vmem [#allocation8], %s292
        %p294 = pneg %p95
        %p295 = pneg %p92
        %s296 = sand.u32 %s32, 1
        %s297 = scalar_lea.sflag [#allocation9], %s296
        %s298 = sand.u32 %s112, 1
        %s299 = smul.addr %s298, 128
        %s300 = scalar_lea.vmem [#allocation10], %s299
        %p301 = pneg %p125
        %p302 = pneg %p122
        %p303 = pneg %p151
        %p304 = pneg %p148
        %s305 = sand.u32 %s138, 1
        %s306 = scalar_lea.sflag [#allocation7], %s305
        %s307 = sand.u32 %s138, 1
        %s308 = smul.addr %s307, 32
        %s309 = scalar_lea.vmem [#allocation11], %s308
        %s310 = smul.u32 2, %s36
        %s311 = sld [smem:[#allocation4 + %s36]]
        %s312 = smul.u32 32, %s37
        %s313 = sld [smem:[#allocation4 + %s36]]
        %s314 = smul.u32 16, %s37
        %s315 = smul.u32 2, %s36
        %p316 = scmp.eq.s32.totalorder %s37, 0
        // Predicated region
        $region45: #{tpu_custom_call.1} parent=31 // pred_check
          %p317 = pneg %p316
        $region46: #{tpu_custom_call.1} parent=31 // pred_check_branch
          %319 = sbr.rel (%p317) target = $region48
        $region47: #{tpu_custom_call.1} parent=31 // pred_region
          %320 = vst [vmem:[#allocation2] sm:$0xff] 0.0
          %321 = vst [vmem:[#allocation2 + $0x8] sm:$0xff] 0.0
          %322 = vst [vmem:[#allocation2 + $0x10] sm:$0xff] 0.0
          %323 = vst [vmem:[#allocation2 + $0x18] sm:$0xff] 0.0
        $region48: #{tpu_custom_call.1} parent=31 // pred_fallthru
          _
        %v324 = vld [vmem:[%s256] sm:$0xff]
        %v325 = vld [vmem:[%s256 + $0x8] sm:$0xff]
        %v326 = vld [vmem:[%s266] sm:$0xff]
        %v327 = vld [vmem:[%s266 + $0x8] sm:$0xff]
        %v328 = vld [vmem:[%s266 + $0x10] sm:$0xff]
        %v329 = vld [vmem:[%s266 + $0x18] sm:$0xff]
        %v330 = vld [vmem:[%s266 + $0x20] sm:$0xff]
        %v331 = vld [vmem:[%s266 + $0x28] sm:$0xff]
        %v332 = vld [vmem:[%s266 + $0x30] sm:$0xff]
        %v333 = vld [vmem:[%s266 + $0x38] sm:$0xff]
        %v334 = vld [vmem:[%s266 + $0x40] sm:$0xff]
        %v335 = vld [vmem:[%s266 + $0x48] sm:$0xff]
        %v336 = vld [vmem:[%s266 + $0x50] sm:$0xff]
        %v337 = vld [vmem:[%s266 + $0x58] sm:$0xff]
        %v338 = vld [vmem:[%s266 + $0x60] sm:$0xff]
        %v339 = vld [vmem:[%s266 + $0x68] sm:$0xff]
        %v340 = vld [vmem:[%s266 + $0x70] sm:$0xff]
        %v341 = vld [vmem:[%s266 + $0x78] sm:$0xff]
        %v342 = vld [vmem:[%s266 + $0x80] sm:$0xff]
        %v343 = vld [vmem:[%s266 + $0x88] sm:$0xff]
        %v344 = vld [vmem:[%s266 + $0x90] sm:$0xff]
        %v345 = vld [vmem:[%s266 + $0x98] sm:$0xff]
        %v346 = vld [vmem:[%s266 + $0xa0] sm:$0xff]
        %v347 = vld [vmem:[%s266 + $0xa8] sm:$0xff]
        %v348 = vld [vmem:[%s266 + $0xb0] sm:$0xff]
        %v349 = vld [vmem:[%s266 + $0xb8] sm:$0xff]
        %v350 = vld [vmem:[%s266 + $0xc0] sm:$0xff]
        %v351 = vld [vmem:[%s266 + $0xc8] sm:$0xff]
        %v352 = vld [vmem:[%s266 + $0xd0] sm:$0xff]
        %v353 = vld [vmem:[%s266 + $0xd8] sm:$0xff]
        %v354 = vld [vmem:[%s266 + $0xe0] sm:$0xff]
        %v355 = vld [vmem:[%s266 + $0xe8] sm:$0xff]
        %v356 = vld [vmem:[%s266 + $0xf0] sm:$0xff]
        %v357 = vld [vmem:[%s266 + $0xf8] sm:$0xff]
        %v360 = vunpack.c.l.b16 %v324
        %v361 = vunpack.c.h.b16 %v324
        %v362 = vunpack.c.l.b16 %v325
        %v363 = vunpack.c.h.b16 %v325
        %v364 = vpack.c.b16 %v362, %v360
        %v365 = vpack.c.b16 %v363, %v361
        %v400 = vunpack.c.l.b16 %v326
        %v401 = vunpack.c.h.b16 %v326
        %v402 = vunpack.c.l.b16 %v327
        %v403 = vunpack.c.h.b16 %v327
        %v404 = vunpack.c.l.b16 %v328
        %v405 = vunpack.c.h.b16 %v328
        %v406 = vunpack.c.l.b16 %v329
        %v407 = vunpack.c.h.b16 %v329
        %v408 = vunpack.c.l.b16 %v330
        %v409 = vunpack.c.h.b16 %v330
        %v410 = vunpack.c.l.b16 %v331
        %v411 = vunpack.c.h.b16 %v331
        %v412 = vunpack.c.l.b16 %v332
        %v413 = vunpack.c.h.b16 %v332
        %v414 = vunpack.c.l.b16 %v333
        %v415 = vunpack.c.h.b16 %v333
        %v416 = vunpack.c.l.b16 %v334
        %v417 = vunpack.c.h.b16 %v334
        %v418 = vunpack.c.l.b16 %v335
        %v419 = vunpack.c.h.b16 %v335
        %v420 = vunpack.c.l.b16 %v336
        %v421 = vunpack.c.h.b16 %v336
        %v422 = vunpack.c.l.b16 %v337
        %v423 = vunpack.c.h.b16 %v337
        %v424 = vunpack.c.l.b16 %v338
        %v425 = vunpack.c.h.b16 %v338
        %v426 = vunpack.c.l.b16 %v339
        %v427 = vunpack.c.h.b16 %v339
        %v428 = vunpack.c.l.b16 %v340
        %v429 = vunpack.c.h.b16 %v340
        %v430 = vunpack.c.l.b16 %v341
        %v431 = vunpack.c.h.b16 %v341
        %v432 = vunpack.c.l.b16 %v342
        %v433 = vunpack.c.h.b16 %v342
        %v434 = vunpack.c.l.b16 %v343
        %v435 = vunpack.c.h.b16 %v343
        %v436 = vunpack.c.l.b16 %v344
        %v437 = vunpack.c.h.b16 %v344
        %v438 = vunpack.c.l.b16 %v345
        %v439 = vunpack.c.h.b16 %v345
        %v440 = vunpack.c.l.b16 %v346
        %v441 = vunpack.c.h.b16 %v346
        %v442 = vunpack.c.l.b16 %v347
        %v443 = vunpack.c.h.b16 %v347
        %v444 = vunpack.c.l.b16 %v348
        %v445 = vunpack.c.h.b16 %v348
        %v446 = vunpack.c.l.b16 %v349
        %v447 = vunpack.c.h.b16 %v349
        %v448 = vunpack.c.l.b16 %v350
        %v449 = vunpack.c.h.b16 %v350
        %v450 = vunpack.c.l.b16 %v351
        %v451 = vunpack.c.h.b16 %v351
        %v452 = vunpack.c.l.b16 %v352
        %v453 = vunpack.c.h.b16 %v352
        %v454 = vunpack.c.l.b16 %v353
        %v455 = vunpack.c.h.b16 %v353
        %v456 = vunpack.c.l.b16 %v354
        %v457 = vunpack.c.h.b16 %v354
        %v458 = vunpack.c.l.b16 %v355
        %v459 = vunpack.c.h.b16 %v355
        %v460 = vunpack.c.l.b16 %v356
        %v461 = vunpack.c.h.b16 %v356
        %v462 = vunpack.c.l.b16 %v357
        %v463 = vunpack.c.h.b16 %v357
        %v464 = vpack.c.b16 %v402, %v400
        %v465 = vpack.c.b16 %v403, %v401
        %v466 = vpack.c.b16 %v406, %v404
        %v467 = vpack.c.b16 %v407, %v405
        %v468 = vpack.c.b16 %v410, %v408
        %v469 = vpack.c.b16 %v411, %v409
        %v470 = vpack.c.b16 %v414, %v412
        %v471 = vpack.c.b16 %v415, %v413
        %v472 = vpack.c.b16 %v418, %v416
        %v473 = vpack.c.b16 %v419, %v417
        %v474 = vpack.c.b16 %v422, %v420
        %v475 = vpack.c.b16 %v423, %v421
        %v476 = vpack.c.b16 %v426, %v424
        %v477 = vpack.c.b16 %v427, %v425
        %v478 = vpack.c.b16 %v430, %v428
        %v479 = vpack.c.b16 %v431, %v429
        %v480 = vpack.c.b16 %v434, %v432
        %v481 = vpack.c.b16 %v435, %v433
        %v482 = vpack.c.b16 %v438, %v436
        %v483 = vpack.c.b16 %v439, %v437
        %v484 = vpack.c.b16 %v442, %v440
        %v485 = vpack.c.b16 %v443, %v441
        %v486 = vpack.c.b16 %v446, %v444
        %v487 = vpack.c.b16 %v447, %v445
        %v488 = vpack.c.b16 %v450, %v448
        %v489 = vpack.c.b16 %v451, %v449
        %v490 = vpack.c.b16 %v454, %v452
        %v491 = vpack.c.b16 %v455, %v453
        %v492 = vpack.c.b16 %v458, %v456
        %v493 = vpack.c.b16 %v459, %v457
        %v494 = vpack.c.b16 %v462, %v460
        %v495 = vpack.c.b16 %v463, %v461
        %528 = vmatpush.bf16.xpose.msra.mxu0 %v478
        %529 = vmatpush.bf16.xpose.msra.mxu0 %v476
        %530 = vmatpush.bf16.xpose.msra.mxu0 %v474
        %531 = vmatpush.bf16.xpose.msra.mxu0 %v472
        %532 = vmatpush.bf16.xpose.msra.mxu0 %v470
        %533 = vmatpush.bf16.xpose.msra.mxu0 %v468
        %534 = vmatpush.bf16.xpose.msra.mxu0 %v466
        %535 = vmatpush.bf16.xpose.msra.mxu0 %v464
        %536 = vmatmul.bf16.gmra.mxu0 %v364
        %v537 = vpop.f32.mrf.mxu0
        %v538 = vadd.f32 0.0, %v537
        %v539 = vpop.f32.mrf.mxu0
        %v540 = vadd.f32 0.0, %v539
        %541 = vdwg.mxu0
        %542 = vmatpush.bf16.xpose.msra.mxu0 %v479
        %543 = vmatpush.bf16.xpose.msra.mxu0 %v477
        %544 = vmatpush.bf16.xpose.msra.mxu0 %v475
        %545 = vmatpush.bf16.xpose.msra.mxu0 %v473
        %546 = vmatpush.bf16.xpose.msra.mxu0 %v471
        %547 = vmatpush.bf16.xpose.msra.mxu0 %v469
        %548 = vmatpush.bf16.xpose.msra.mxu0 %v467
        %549 = vmatpush.bf16.xpose.msra.mxu0 %v465
        %550 = vmatmul.bf16.gmra.mxu0 %v365
        %v551 = vpop.f32.mrf.mxu0
        %v552 = vadd.f32 %v538, %v551
        %v553 = vpop.f32.mrf.mxu0
        %v554 = vadd.f32 %v540, %v553
        %555 = vdwg.mxu0
        %556 = vmatpush.bf16.xpose.msra.mxu0 %v494
        %557 = vmatpush.bf16.xpose.msra.mxu0 %v492
        %558 = vmatpush.bf16.xpose.msra.mxu0 %v490
        %559 = vmatpush.bf16.xpose.msra.mxu0 %v488
        %560 = vmatpush.bf16.xpose.msra.mxu0 %v486
        %561 = vmatpush.bf16.xpose.msra.mxu0 %v484
        %562 = vmatpush.bf16.xpose.msra.mxu0 %v482
        %563 = vmatpush.bf16.xpose.msra.mxu0 %v480
        %564 = vmatmul.bf16.gmra.mxu0 %v364
        %v565 = vpop.f32.mrf.mxu0
        %v566 = vadd.f32 0.0, %v565
        %v567 = vpop.f32.mrf.mxu0
        %v568 = vadd.f32 0.0, %v567
        %569 = vdwg.mxu0
        %570 = vmatpush.bf16.xpose.msra.mxu0 %v495
        %571 = vmatpush.bf16.xpose.msra.mxu0 %v493
        %572 = vmatpush.bf16.xpose.msra.mxu0 %v491
        %573 = vmatpush.bf16.xpose.msra.mxu0 %v489
        %574 = vmatpush.bf16.xpose.msra.mxu0 %v487
        %575 = vmatpush.bf16.xpose.msra.mxu0 %v485
        %576 = vmatpush.bf16.xpose.msra.mxu0 %v483
        %577 = vmatpush.bf16.xpose.msra.mxu0 %v481
        %578 = vmatmul.bf16.gmra.mxu0 %v365
        %v579 = vpop.f32.mrf.mxu0
        %v580 = vadd.f32 %v566, %v579
        %v581 = vpop.f32.mrf.mxu0
        %v582 = vadd.f32 %v568, %v581
        %583 = vdwg.mxu0
        %v584 = vxor.u32 %v552, 2147483648
        %v585 = vxor.u32 %v554, 2147483648
        %v586 = vmul.f32 %v584, 1.442695
        %v587 = vpow.pop %v586
        %v588 = vmul.f32 %v585, 1.442695
        %v589 = vpow.pop %v588
        %v590 = vadd.f32 %v587, 1.0
        %v591 = vadd.f32 %v589, 1.0
        %v592 = vrcp.pop %v590
        %v593 = vmul.f32 %v590, %v592
        %v594 = vsub.f32 1.0, %v593
        %v595 = vmul.f32 %v592, %v594
        %v596 = vadd.f32 %v592, %v595
        %vm597 = vweird.f32 %v590
        %vm598 = vweird.f32 %v592
        %vm599 = vmor %vm597, %vm598
        %v600 = vsel %vm599, %v592, %v596
        %v601 = vand.u32 2147483647, %v590
        %vm602 = vcmp.eq.f32.partialorder %v601, 8.507059e+37
        %v603 = vand.u32 %v590, 2147483648
        %v604 = vor.u32 1.1754944e-38, %v603
        %v605 = vsel %vm602, %v604, %v600
        %v606 = vmul.f32 1.0, %v605
        %v607 = vrcp.pop %v591
        %v608 = vmul.f32 %v591, %v607
        %v609 = vsub.f32 1.0, %v608
        %v610 = vmul.f32 %v607, %v609
        %v611 = vadd.f32 %v607, %v610
        %vm612 = vweird.f32 %v591
        %vm613 = vweird.f32 %v607
        %vm614 = vmor %vm612, %vm613
        %v615 = vsel %vm614, %v607, %v611
        %v616 = vand.u32 2147483647, %v591
        %vm617 = vcmp.eq.f32.partialorder %v616, 8.507059e+37
        %v618 = vand.u32 %v591, 2147483648
        %v619 = vor.u32 1.1754944e-38, %v618
        %v620 = vsel %vm617, %v619, %v615
        %v621 = vmul.f32 1.0, %v620
        %v622 = vmul.f32 %v552, %v606
        %v623 = vmul.f32 %v554, %v621
        %v624 = vmul.f32 %v622, %v580
        %v625 = vmul.f32 %v623, %v582
        %v626 = vld [vmem:[#allocation2] sm:$0xff]
        %v627 = vld [vmem:[#allocation2 + $0x8] sm:$0xff]
        %v628 = vld [vmem:[#allocation2 + $0x10] sm:$0xff]
        %v629 = vld [vmem:[#allocation2 + $0x18] sm:$0xff]
        %v630 = vpack.c.bf16 %v625, %v624
        %v631 = vld [vmem:[%s276] sm:$0xff]
        %v632 = vld [vmem:[%s276 + $0x8] sm:$0xff]
        %v633 = vld [vmem:[%s276 + $0x10] sm:$0xff]
        %v634 = vld [vmem:[%s276 + $0x18] sm:$0xff]
        %v635 = vld [vmem:[%s276 + $0x20] sm:$0xff]
        %v636 = vld [vmem:[%s276 + $0x28] sm:$0xff]
        %v637 = vld [vmem:[%s276 + $0x30] sm:$0xff]
        %v638 = vld [vmem:[%s276 + $0x38] sm:$0xff]
        %v639 = vld [vmem:[%s276 + $0x40] sm:$0xff]
        %v640 = vld [vmem:[%s276 + $0x48] sm:$0xff]
        %v641 = vld [vmem:[%s276 + $0x50] sm:$0xff]
        %v642 = vld [vmem:[%s276 + $0x58] sm:$0xff]
        %v643 = vld [vmem:[%s276 + $0x60] sm:$0xff]
        %v644 = vld [vmem:[%s276 + $0x68] sm:$0xff]
        %v645 = vld [vmem:[%s276 + $0x70] sm:$0xff]
        %v646 = vld [vmem:[%s276 + $0x78] sm:$0xff]
        %v663 = vunpack.c.l.b16 %v631
        %v664 = vunpack.c.h.b16 %v631
        %v665 = vunpack.c.l.b16 %v632
        %v666 = vunpack.c.h.b16 %v632
        %v667 = vunpack.c.l.b16 %v633
        %v668 = vunpack.c.h.b16 %v633
        %v669 = vunpack.c.l.b16 %v634
        %v670 = vunpack.c.h.b16 %v634
        %v671 = vunpack.c.l.b16 %v635
        %v672 = vunpack.c.h.b16 %v635
        %v673 = vunpack.c.l.b16 %v636
        %v674 = vunpack.c.h.b16 %v636
        %v675 = vunpack.c.l.b16 %v637
        %v676 = vunpack.c.h.b16 %v637
        %v677 = vunpack.c.l.b16 %v638
        %v678 = vunpack.c.h.b16 %v638
        %v679 = vunpack.c.l.b16 %v639
        %v680 = vunpack.c.h.b16 %v639
        %v681 = vunpack.c.l.b16 %v640
        %v682 = vunpack.c.h.b16 %v640
        %v683 = vunpack.c.l.b16 %v641
        %v684 = vunpack.c.h.b16 %v641
        %v685 = vunpack.c.l.b16 %v642
        %v686 = vunpack.c.h.b16 %v642
        %v687 = vunpack.c.l.b16 %v643
        %v688 = vunpack.c.h.b16 %v643
        %v689 = vunpack.c.l.b16 %v644
        %v690 = vunpack.c.h.b16 %v644
        %v691 = vunpack.c.l.b16 %v645
        %v692 = vunpack.c.h.b16 %v645
        %v693 = vunpack.c.l.b16 %v646
        %v694 = vunpack.c.h.b16 %v646
        %v695 = vpack.c.b16 %v665, %v663
        %v696 = vpack.c.b16 %v666, %v664
        %v697 = vpack.c.b16 %v669, %v667
        %v698 = vpack.c.b16 %v670, %v668
        %v699 = vpack.c.b16 %v673, %v671
        %v700 = vpack.c.b16 %v674, %v672
        %v701 = vpack.c.b16 %v677, %v675
        %v702 = vpack.c.b16 %v678, %v676
        %v703 = vpack.c.b16 %v681, %v679
        %v704 = vpack.c.b16 %v682, %v680
        %v705 = vpack.c.b16 %v685, %v683
        %v706 = vpack.c.b16 %v686, %v684
        %v707 = vpack.c.b16 %v689, %v687
        %v708 = vpack.c.b16 %v690, %v688
        %v709 = vpack.c.b16 %v693, %v691
        %v710 = vpack.c.b16 %v694, %v692
        %727 = vmatpush.bf16.msra.mxu0 %v709
        %728 = vmatpush.bf16.msra.mxu0 %v707
        %729 = vmatpush.bf16.msra.mxu0 %v705
        %730 = vmatpush.bf16.msra.mxu0 %v703
        %731 = vmatpush.bf16.msra.mxu0 %v701
        %732 = vmatpush.bf16.msra.mxu0 %v699
        %733 = vmatpush.bf16.msra.mxu0 %v697
        %734 = vmatpush.bf16.msra.mxu0 %v695
        %735 = vmatmul.bf16.gmra.mxu0 %v630
        %v736 = vpop.f32.mrf.mxu0
        %v737 = vadd.f32 0.0, %v736
        %v738 = vpop.f32.mrf.mxu0
        %v739 = vadd.f32 0.0, %v738
        %740 = vdwg.mxu0
        %741 = vmatpush.bf16.msra.mxu0 %v710
        %742 = vmatpush.bf16.msra.mxu0 %v708
        %743 = vmatpush.bf16.msra.mxu0 %v706
        %744 = vmatpush.bf16.msra.mxu0 %v704
        %745 = vmatpush.bf16.msra.mxu0 %v702
        %746 = vmatpush.bf16.msra.mxu0 %v700
        %747 = vmatpush.bf16.msra.mxu0 %v698
        %748 = vmatpush.bf16.msra.mxu0 %v696
        %749 = vmatmul.bf16.gmra.mxu0 %v630
        %v750 = vpop.f32.mrf.mxu0
        %v751 = vadd.f32 0.0, %v750
        %v752 = vpop.f32.mrf.mxu0
        %v753 = vadd.f32 0.0, %v752
        %754 = vdwg.mxu0
        %v755 = vadd.f32 %v626, %v737
        %v756 = vadd.f32 %v627, %v751
        %v757 = vadd.f32 %v628, %v739
        %v758 = vadd.f32 %v629, %v753
        %759 = vst [vmem:[#allocation2] sm:$0xff] %v755
        %760 = vst [vmem:[#allocation2 + $0x8] sm:$0xff] %v756
        %761 = vst [vmem:[#allocation2 + $0x10] sm:$0xff] %v757
        %762 = vst [vmem:[#allocation2 + $0x18] sm:$0xff] %v758
        %p763 = scmp.eq.s32.totalorder %s37, 3
        // Predicated region
        $region49: #{tpu_custom_call.1} parent=31 // pred_check
          %p764 = pneg %p763
        $region50: #{tpu_custom_call.1} parent=31 // pred_check_branch
          %766 = sbr.rel (%p764) target = $region52
        $region51: #{tpu_custom_call.1} parent=31 // pred_region
          %v767 = vld [vmem:[#allocation2] sm:$0xff]
          %v768 = vld [vmem:[#allocation2 + $0x8] sm:$0xff]
          %v769 = vld [vmem:[#allocation2 + $0x10] sm:$0xff]
          %v770 = vld [vmem:[#allocation2 + $0x18] sm:$0xff]
          %771 = vst [vmem:[%s309] sm:$0xff] %v767
          %772 = vst [vmem:[%s309 + $0x8] sm:$0xff] %v768
          %773 = vst [vmem:[%s309 + $0x10] sm:$0xff] %v769
          %774 = vst [vmem:[%s309 + $0x18] sm:$0xff] %v770
        $region52: #{tpu_custom_call.1} parent=31 // pred_fallthru
          _
        %s775 = sand.u32 %s138, 1
        %s776 = scalar_lea.sflag [#allocation7], %s775
        %s777 = sand.u32 %s138, 1
        %s778 = smul.addr %s777, 32
        %s779 = scalar_lea.vmem [#allocation11], %s778
        // Predicated region
        $region53: #{tpu_custom_call.1} parent=31 // pred_check
          %p780 = pneg %p148
        $region54: #{tpu_custom_call.1} parent=31 // pred_check_branch
          %782 = sbr.rel (%p780) target = $region56
        $region55: #{tpu_custom_call.1} parent=31 // pred_region
          %s783 = smul.u32 2, %s36
          %785 = vsyncadd %s776, 0
          %s786 = smul.addr %s783, 2
          %s787 = smul.addr %s786, 8
          %s788 = scalar_lea.hbm %s4, %s787
          %s789 = sshll.u32 %s779, 4
          %s790 = int_to_ptr.vmem [resolvable:$true] %s789
          %s791 = sshll.u32 %s788, 4
          %s792 = int_to_ptr.hbm [resolvable:$true] %s791
          %797 = dma.vmem_to_hbm [thread:$0]  %s790, 512, %s792, %s776, 256, 256, 16
        $region56: #{tpu_custom_call.1} parent=31 // pred_fallthru
          _
      $region32: #{tpu_custom_call.1} parent=5 // pred_fallthru
        _
      %p798 = scmp.le.s32.totalorder 2, %s27
      // Predicated region
      $region57: #{tpu_custom_call.1} parent=5 // pred_check
        %p799 = pneg %p798
      $region58: #{tpu_custom_call.1} parent=5 // pred_check_branch
        %801 = sbr.rel (%p799) target = $region60
      $region59: #{tpu_custom_call.1} parent=5 // pred_region
        %s802 = ssub.s32 %s27, 2
        // Predicated region
        $region61: #{tpu_custom_call.1} parent=59 // pred_check
          %p803 = pneg %p154
        $region62: #{tpu_custom_call.1} parent=59 // pred_check_branch
          %805 = sbr.rel (%p803) target = $region64
        $region63: #{tpu_custom_call.1} parent=59 // pred_region
          %s806 = sand.u32 %s139, 1
          %s807 = scalar_lea.sflag [#allocation7], %s806
          %s808 = sand.u32 %s139, 1
          %s809 = smul.addr %s808, 32
          %s810 = scalar_lea.vmem [#allocation11], %s809
          %812 = dma.done %s807, 512
        $region64: #{tpu_custom_call.1} parent=59 // pred_fallthru
          _
      $region60: #{tpu_custom_call.1} parent=5 // pred_fallthru
        _
    $region6: #{tpu_custom_call.1} parent=1 // loop_footer
      %s31 = sadd.s32 1, %s27
    $region7: #{tpu_custom_call.1} parent=1 // loop_footer_branch
      %26 = sbr.rel target = $region3
    $region8: #{tpu_custom_call.1} parent=1 // loop_exit
      _
    %813 = vsyncpa [#allocation6], 1
    %s814 = scalar_lea.sflag [#allocation6], 1
    %815 = vsyncpa %s814, 1
    %816 = vsyncpa [#allocation9], 1
    %s817 = scalar_lea.sflag [#allocation9], 1
    %818 = vsyncpa %s817, 1
    %819 = vsyncpa [#allocation7], 1
    %s820 = scalar_lea.sflag [#allocation7], 1
    %821 = vsyncpa %s820, 1

</llo_original>
